<compile_context>
chip_gen: v7x
topology: tpu7x:2x2x1
jax: 0.10.0
libtpu: 0.0.40
codegen_flags: <defaults>
</compile_context>

<pallas_src>
import jax
import jax.numpy as jnp
from jax.experimental import pallas as pl
from jax.experimental.pallas import tpu as pltpu

HIGHWAY_BIAS = -2.0  # the module's fixed `bias` constant added to the gate pre-activation


def highway_kernel(x_ref, w_ref, b_ref, o_ref):
    f = o_ref.shape[-1]

    # Native-dtype MXU inputs, f32 accumulation. One fused matmul:
    #   (TM, F) @ (F, 2F) -> (TM, 2F)   [first F cols = gate, last F cols = transform]
    x = x_ref[...]
    acc = jnp.dot(x, w_ref[...], preferred_element_type=jnp.float32) + b_ref[...]

    t_gate = jax.nn.sigmoid(acc[:, :f] + HIGHWAY_BIAS)   # transform gate
    g_out = jnp.maximum(acc[:, f:], 0.0)                 # relu path

    x_f32 = x.astype(jnp.float32)
    o_ref[...] = (t_gate * g_out + (1.0 - t_gate) * x_f32).astype(o_ref.dtype)


def _vmem_limit_bytes():
    # ~3/4 of physical VMEM: 96 MiB on v5e/v6e (128 MiB), 48 MiB on v7x (64 MiB).
    try:
        return int(pltpu.get_tpu_info().vmem_capacity_bytes * 3 // 4)
    except Exception:
        return 48 * 1024 * 1024


def highway_forward(x, wt, bt, wg, bg, *, tm=512):
    """x: (B, F); wt, wg: (F, F) already transposed to (in, out); bt, bg: (1, F)."""
    B, F = x.shape

    # Fuse the two linear layers into one lane-dense (F, 2F) weight slab + (1, 2F) bias.
    w = jnp.concatenate([wt, wg], axis=1)                       # (F, 2F), native dtype
    b = jnp.concatenate([bt, bg], axis=1).astype(jnp.float32)   # (1, 2F), f32 (matches acc)

    # Batch tile: full extent if B fits in one tile, else an 8-aligned tile with padding.
    if B <= tm:
        TM, Bp = B, B
        xp = x
    else:
        TM = max(8, (tm // 8) * 8)
        Bp = ((B + TM - 1) // TM) * TM
        xp = jnp.pad(x, ((0, Bp - B), (0, 0))) if Bp != B else x

    grid = (Bp // TM,)
    itemsize = jnp.dtype(x.dtype).itemsize
    cost = pl.CostEstimate(
        flops=4 * Bp * F * F,                     # (TM,F)@(F,2F) per tile
        transcendentals=Bp * F,                   # sigmoid
        bytes_accessed=(2 * Bp * F + 2 * F * F + 2 * F) * itemsize,
    )

    out = pl.pallas_call(
        highway_kernel,
        out_shape=jax.ShapeDtypeStruct((Bp, F), x.dtype),
        grid_spec=pltpu.PrefetchScalarGridSpec(
            num_scalar_prefetch=0,
            grid=grid,
            in_specs=[
                pl.BlockSpec((TM, F), lambda i: (i, 0)),       # x: walks batch
                pl.BlockSpec((F, 2 * F), lambda i: (0, 0)),    # fused weights: resident
                pl.BlockSpec((1, 2 * F), lambda i: (0, 0)),    # fused biases: resident
            ],
            out_specs=pl.BlockSpec((TM, F), lambda i: (i, 0)),
        ),
        compiler_params=pltpu.CompilerParams(
            dimension_semantics=("parallel",),     # shard batch tiles across TCs (v7x)
            vmem_limit_bytes=_vmem_limit_bytes(),
        ),
        cost_estimate=cost,
    )(xp, w, b)

    if Bp != B:
        out = out[:B]
    return out


def highway_reference(x, wt, bt, wg, bg):
    hi = jax.lax.Precision.HIGHEST
    t = jax.nn.sigmoid(jnp.dot(x, wt, precision=hi) + bt + HIGHWAY_BIAS)
    g = jnp.maximum(jnp.dot(x, wg, precision=hi) + bg, 0.0)
    return t * g + (1.0 - t) * x


if __name__ == "__main__":
    # Small shapes consistent with the module: in_features == out_features so the
    # residual carry path is well-defined; F=128 keeps the output lane-dense and
    # B=256 with tm=128 exercises the batch-tiled grid (2 tiles).
    batch, features = 256, 128

    key = jax.random.PRNGKey(0)
    kx, kwt, kbt, kwg, kbg = jax.random.split(key, 5)

    # Deterministic parameter init (PyTorch nn.Linear default: U(-1/sqrt(in), 1/sqrt(in)))
    bound = 1.0 / jnp.sqrt(jnp.float32(features))
    x = jax.random.normal(kx, (batch, features), dtype=jnp.float32)
    wt = jax.random.uniform(kwt, (features, features), jnp.float32, -bound, bound)
    bt = jax.random.uniform(kbt, (1, features), jnp.float32, -bound, bound)
    wg = jax.random.uniform(kwg, (features, features), jnp.float32, -bound, bound)
    bg = jax.random.uniform(kbg, (1, features), jnp.float32, -bound, bound)

    out = highway_forward(x, wt, bt, wg, bg, tm=128)
    out = jax.block_until_ready(out)

    ref = highway_reference(x, wt, bt, wg, bg)
    assert out.shape == (batch, features)
    assert jnp.allclose(out, ref, atol=1e-4, rtol=1e-4), "Pallas output mismatch vs reference"

    print("KERNEL_OK")
</pallas_src>

<mosaic_0001>
module attributes {stable_mosaic.version = 11 : i64} {
  func.func @highway_kernel(%arg0: i32, %arg1: memref<128x128xf32, #tpu.memory_space<vmem>>, %arg2: memref<128x256xf32, #tpu.memory_space<vmem>>, %arg3: memref<1x256xf32, #tpu.memory_space<vmem>>, %arg4: memref<128x128xf32, #tpu.memory_space<vmem>>) attributes {dimension_semantics = [#tpu.dimension_semantics<parallel>], iteration_bounds = array<i64: 2>, scalar_prefetch = 0 : i64, scratch_operands = 0 : i64, tpu.core_type = #tpu.core_type<tc>, window_params = [{transform_indices = @transform_0, window_bounds = array<i64: 128, 128>}, {pipeline_mode = #tpu.pipeline_mode<synchronous>, transform_indices = @transform_1, window_bounds = array<i64: 128, 256>}, {pipeline_mode = #tpu.pipeline_mode<synchronous>, transform_indices = @transform_2, window_bounds = array<i64: 1, 256>}, {transform_indices = @transform_3, window_bounds = array<i64: 128, 128>}]} {
    %c0 = arith.constant 0 : index
    %c0_0 = arith.constant 0 : index
    %0 = vector.load %arg1[%c0, %c0_0] : memref<128x128xf32, #tpu.memory_space<vmem>>, vector<128x128xf32>
    %c0_1 = arith.constant 0 : index
    %c0_2 = arith.constant 0 : index
    %1 = vector.load %arg2[%c0_1, %c0_2] : memref<128x256xf32, #tpu.memory_space<vmem>>, vector<128x256xf32>
    %cst = arith.constant dense<0.000000e+00> : vector<128x256xf32>
    %2 = tpu.matmul %0, %1, %cst {dimension_numbers = #tpu.dot_dimension_numbers<[1], [0], [0], [1], [0, 0, 1, 1], [], []>} : vector<128x128xf32>, vector<128x256xf32>, vector<128x256xf32> -> vector<128x256xf32>
    %c0_3 = arith.constant 0 : index
    %c0_4 = arith.constant 0 : index
    %3 = vector.load %arg3[%c0_3, %c0_4] : memref<1x256xf32, #tpu.memory_space<vmem>>, vector<1x256xf32>
    %4 = vector.broadcast %3 : vector<1x256xf32> to vector<128x256xf32>
    %5 = arith.addf %2, %4 : vector<128x256xf32>
    %6 = vector.extract_strided_slice %5 {offsets = [0, 0], sizes = [128, 128], strides = [1, 1]} : vector<128x256xf32> to vector<128x128xf32>
    %cst_5 = arith.constant -2.000000e+00 : f32
    %7 = vector.broadcast %cst_5 : f32 to vector<128x128xf32>
    %8 = arith.addf %6, %7 : vector<128x128xf32>
    %9 = arith.negf %8 : vector<128x128xf32>
    %10 = math.exp %9 : vector<128x128xf32>
    %cst_6 = arith.constant 1.000000e+00 : f32
    %11 = vector.broadcast %cst_6 : f32 to vector<128x128xf32>
    %12 = arith.addf %11, %10 : vector<128x128xf32>
    %13 = arith.divf %11, %12 : vector<128x128xf32>
    %14 = vector.extract_strided_slice %5 {offsets = [0, 128], sizes = [128, 128], strides = [1, 1]} : vector<128x256xf32> to vector<128x128xf32>
    %cst_7 = arith.constant 0.000000e+00 : f32
    %15 = vector.broadcast %cst_7 : f32 to vector<128x128xf32>
    %16 = arith.maximumf %14, %15 : vector<128x128xf32>
    %17 = arith.mulf %13, %16 : vector<128x128xf32>
    %cst_8 = arith.constant 1.000000e+00 : f32
    %18 = vector.broadcast %cst_8 : f32 to vector<128x128xf32>
    %19 = arith.subf %18, %13 : vector<128x128xf32>
    %20 = arith.mulf %19, %0 : vector<128x128xf32>
    %21 = arith.addf %17, %20 : vector<128x128xf32>
    %c0_9 = arith.constant 0 : index
    %c0_10 = arith.constant 0 : index
    %22 = vector.load %arg4[%c0_9, %c0_10] : memref<128x128xf32, #tpu.memory_space<vmem>>, vector<128x128xf32>
    tpu.vector_store %arg4[%c0_9, %c0_10], %21 {strides = array<i32>} : memref<128x128xf32, #tpu.memory_space<vmem>>, vector<128x128xf32>,
    return
  }
  func.func @transform_0(%arg0: i32) -> (i32, i32) {
    %c0_i32 = arith.constant 0 : i32
    %c0_i32_0 = arith.constant 0 : i32
    return %arg0, %c0_i32 : i32, i32
  }
  func.func @transform_1(%arg0: i32) -> (i32, i32) {
    %c0_i32 = arith.constant 0 : i32
    %c0_i32_0 = arith.constant 0 : i32
    %c0_i32_1 = arith.constant 0 : i32
    return %c0_i32, %c0_i32_0 : i32, i32
  }
  func.func @transform_2(%arg0: i32) -> (i32, i32) {
    %c0_i32 = arith.constant 0 : i32
    %c0_i32_0 = arith.constant 0 : i32
    %c0_i32_1 = arith.constant 0 : i32
    return %c0_i32, %c0_i32_0 : i32, i32
  }
  func.func @transform_3(%arg0: i32) -> (i32, i32) {
    %c0_i32 = arith.constant 0 : i32
    %c0_i32_0 = arith.constant 0 : i32
    return %arg0, %c0_i32 : i32, i32
  }
}

</mosaic_0001>

<llo_original>
// kernel: tpu_custom_call.1
$region0: #{tpu_custom_call.1}
  #allocation0 [shape = 'u32[]', space=smem, size = 0x4, offset = 0x4, fixed_abs, tag = 'smem constant byte address 0x4 - core index']
  #allocation1 [shape = 'u32[144,128]{1,0:T(1,128)}', space=vmem, size = 0x12000, scoped, tag = 'internal scratch']
  %s0 = inlined_call_operand.hbm [shape: f32[256,128], index: 0, kind: input, shape index: {}]
  %s1 = inlined_call_operand.hbm [shape: f32[128,256], index: 1, kind: input, shape index: {}]
  %s2 = inlined_call_operand.vmem [shape: f32[1,256], index: 2, kind: input, shape index: {}]
  %s3 = inlined_call_operand.hbm [shape: f32[256,128], index: 3, kind: output, shape index: {}]
  %s4 = sld [smem:[#allocation0]]
  $region53: #{tpu_custom_call.1} parent=0
    _
  %s6 = ssub.s32 1, %s4
  %s7 = scalar_select 0, %s6, %s4
  $region1: #{tpu_custom_call.1} parent=0
    #allocation2 [shape = 'u8[131072]{0}', space=vmem, size = 0x20000, scoped, tag = 'input window, operand 0']
    #allocation3 [shape = 's32[2]{0}', space=sflag, size = 0x8, scoped, tag = 'scoped memory for tpu_custom_call.1']
    #allocation4 [shape = 's32[2]{0}', space=sflag, size = 0x8, scoped, tag = 'scoped memory for tpu_custom_call.1']
    #allocation5 [shape = 'u8[131072]{0}', space=vmem, size = 0x20000, scoped, tag = 'input window, operand 1, single buffered']
    #allocation6 [shape = 's32[1]{0}', space=sflag, size = 0x4, scoped, tag = 'scoped memory for tpu_custom_call.1']
    #allocation7 [shape = 'u8[131072]{0}', space=vmem, size = 0x20000, scoped, tag = 'output window, operand 0']
    %8 = vsyncpa [#allocation3], 0
    %s9 = scalar_lea.sflag [#allocation3], 1
    %10 = vsyncpa %s9, 0
    %11 = vsyncpa [#allocation6], 0
    %12 = vsyncpa [#allocation4], 0
    %s13 = scalar_lea.sflag [#allocation4], 1
    %14 = vsyncpa %s13, 0
    loop: start=0, step=1, limit=4
    $region2: #{tpu_custom_call.1} parent=1 // loop_pre_header
      _
    $region3: #{tpu_custom_call.1} parent=1 // loop_header
      %s16 = sphi 0, %s20
      %p17 = scmp.ge.s32.totalorder %s16, 4
      %s26 = sphi 0, %s28
      %s29 = sphi 0, %s26
      %s30 = sphi 0, %s29
      %s46 = sphi 0, %s30
      %s50 = sphi 0, %s50
      %s52 = sphi 0, %s50
      %s53 = sphi 0, %s52
      %s67 = sphi 0, %s53
      %s71 = sphi 0, %s71
      %s73 = sphi 0, %s71
      %s74 = sphi 0, %s73
      %s88 = sphi 0, %s74
      %s94 = sphi 0, %s96
      %s97 = sphi 0, %s94
      %s98 = sphi 0, %s97
      %s114 = sphi 0, %s98
    $region4: #{tpu_custom_call.1} parent=1 // loop_header_branch
      %19 = sbr.rel (%p17) target = $region8
    $region5: #{tpu_custom_call.1} parent=1 // loop_body
      %s21 = ssub.s32 %s16, 1
      %s22 = ssub.s32 %s16, 2
      %s23 = sadd.s32 %s16, 1
      %s24 = ssub.s32 %s16, %s23
      %p25 = scmp.eq.s32.totalorder %s24, 0
      %s27 = sadd.s32 %s26, 1
      %s28 = scalar_select %p25, %s26, %s27
      %p31 = pneg %p25
      %p32 = scmp.eq.s32.totalorder %s16, 1
      %p33 = por %p31, %p32
      %p34 = scmp.ne.s32.totalorder %s26, %s29
      %p35 = scmp.eq.s32.totalorder %s16, 0
      %p36 = por %p34, %p35
      %p37 = scmp.ne.s32.totalorder %s26, %s29
      %p38 = scmp.eq.s32.totalorder %s21, 1
      %p39 = por %p37, %p38
      %p40 = scmp.ne.s32.totalorder %s29, %s30
      %p41 = scmp.eq.s32.totalorder %s21, 0
      %p42 = por %p40, %p41
      %p43 = scmp.ne.s32.totalorder %s29, %s30
      %p44 = scmp.eq.s32.totalorder %s22, 1
      %p45 = por %p43, %p44
      %p47 = scmp.ne.s32.totalorder %s30, %s46
      %p48 = scmp.eq.s32.totalorder %s22, 0
      %p49 = por %p47, %p48
      %s51 = sadd.s32 %s50, 1
      %p54 = scmp.eq.s32.totalorder %s16, 1
      %p55 = scmp.ne.s32.totalorder %s50, %s52
      %p56 = scmp.eq.s32.totalorder %s16, 0
      %p57 = por %p55, %p56
      %p58 = scmp.ne.s32.totalorder %s50, %s52
      %p59 = scmp.eq.s32.totalorder %s21, 1
      %p60 = por %p58, %p59
      %p61 = scmp.ne.s32.totalorder %s52, %s53
      %p62 = scmp.eq.s32.totalorder %s21, 0
      %p63 = por %p61, %p62
      %p64 = scmp.ne.s32.totalorder %s52, %s53
      %p65 = scmp.eq.s32.totalorder %s22, 1
      %p66 = por %p64, %p65
      %p68 = scmp.ne.s32.totalorder %s53, %s67
      %p69 = scmp.eq.s32.totalorder %s22, 0
      %p70 = por %p68, %p69
      %s72 = sadd.s32 %s71, 1
      %p75 = scmp.eq.s32.totalorder %s16, 1
      %p76 = scmp.ne.s32.totalorder %s71, %s73
      %p77 = scmp.eq.s32.totalorder %s16, 0
      %p78 = por %p76, %p77
      %p79 = scmp.ne.s32.totalorder %s71, %s73
      %p80 = scmp.eq.s32.totalorder %s21, 1
      %p81 = por %p79, %p80
      %p82 = scmp.ne.s32.totalorder %s73, %s74
      %p83 = scmp.eq.s32.totalorder %s21, 0
      %p84 = por %p82, %p83
      %p85 = scmp.ne.s32.totalorder %s73, %s74
      %p86 = scmp.eq.s32.totalorder %s22, 1
      %p87 = por %p85, %p86
      %p89 = scmp.ne.s32.totalorder %s74, %s88
      %p90 = scmp.eq.s32.totalorder %s22, 0
      %p91 = por %p89, %p90
      %s92 = ssub.s32 %s16, %s23
      %p93 = scmp.eq.s32.totalorder %s92, 0
      %s95 = sadd.s32 %s94, 1
      %s96 = scalar_select %p93, %s94, %s95
      %p99 = pneg %p93
      %p100 = scmp.eq.s32.totalorder %s16, 1
      %p101 = por %p99, %p100
      %p102 = scmp.ne.s32.totalorder %s94, %s97
      %p103 = scmp.eq.s32.totalorder %s16, 0
      %p104 = por %p102, %p103
      %p105 = scmp.ne.s32.totalorder %s94, %s97
      %p106 = scmp.eq.s32.totalorder %s21, 1
      %p107 = por %p105, %p106
      %p108 = scmp.ne.s32.totalorder %s97, %s98
      %p109 = scmp.eq.s32.totalorder %s21, 0
      %p110 = por %p108, %p109
      %p111 = scmp.ne.s32.totalorder %s97, %s98
      %p112 = scmp.eq.s32.totalorder %s22, 1
      %p113 = por %p111, %p112
      %p115 = scmp.ne.s32.totalorder %s98, %s114
      %p116 = scmp.eq.s32.totalorder %s22, 0
      %p117 = por %p115, %p116
      %p118 = scmp.le.s32.totalorder 1, %s16
      %p119 = scmp.lt.s32.totalorder %s16, 3
      %p120 = pnand %p118, %p119
      %p121 = pneg %p120
      // Predicated region
      $region9: #{tpu_custom_call.1} parent=5 // pred_check
        _
      $region10: #{tpu_custom_call.1} parent=5 // pred_check_branch
        %123 = sbr.rel (%p120) target = $region12
      $region11: #{tpu_custom_call.1} parent=5 // pred_region
        %s124 = ssub.s32 %s16, 1
        // Predicated region
        $region13: #{tpu_custom_call.1} parent=11 // pred_check
          %p125 = pneg %p63
        $region14: #{tpu_custom_call.1} parent=11 // pred_check_branch
          %127 = sbr.rel (%p125) target = $region16
        $region15: #{tpu_custom_call.1} parent=11 // pred_region
          %s129 = ssub.s32 4096, 4096
          %130 = vsyncadd [#allocation6], %s129
          %s131 = sshll.u32 [#allocation5], 4
          %s132 = int_to_ptr.vmem [resolvable:$true] %s131
          %137 = dma.hbm_to_vmem [thread:$0]  %s1, 4096, %s132, [#allocation6], 256, 256, 16
        $region16: #{tpu_custom_call.1} parent=11 // pred_fallthru
          _
        // Predicated region
        $region17: #{tpu_custom_call.1} parent=11 // pred_check
          %p138 = pneg %p84
        $region18: #{tpu_custom_call.1} parent=11 // pred_check_branch
          %140 = sbr.rel (%p138) target = $region20
        $region19: #{tpu_custom_call.1} parent=11 // pred_region
          _
        $region20: #{tpu_custom_call.1} parent=11 // pred_fallthru
          _
      $region12: #{tpu_custom_call.1} parent=5 // pred_fallthru
        _
      %p141 = scmp.lt.s32.totalorder %s16, 2
      // Predicated region
      $region21: #{tpu_custom_call.1} parent=5 // pred_check
        %p142 = pneg %p141
      $region22: #{tpu_custom_call.1} parent=5 // pred_check_branch
        %144 = sbr.rel (%p142) target = $region24
      $region23: #{tpu_custom_call.1} parent=5 // pred_region
        // Predicated region
        $region25: #{tpu_custom_call.1} parent=23 // pred_check
          %p145 = pneg %p36
        $region26: #{tpu_custom_call.1} parent=23 // pred_check_branch
          %147 = sbr.rel (%p145) target = $region28
        $region27: #{tpu_custom_call.1} parent=23 // pred_region
          %s148 = sand.u32 %s26, 1
          %s149 = scalar_lea.sflag [#allocation3], %s148
          %s150 = sand.u32 %s26, 1
          %s151 = smul.addr %s150, 128
          %s152 = scalar_lea.vmem [#allocation2], %s151
          %s153 = smul.u32 16, %s16
          %s155 = ssub.s32 2048, 2048
          %156 = vsyncadd %s149, %s155
          %s157 = smul.addr %s153, 128
          %s158 = scalar_lea.hbm %s0, %s157
          %s159 = sshll.u32 %s152, 4
          %s160 = int_to_ptr.vmem [resolvable:$true] %s159
          %165 = dma.hbm_to_vmem [thread:$0]  %s158, 2048, %s160, %s149, 128, 128, 8
        $region28: #{tpu_custom_call.1} parent=23 // pred_fallthru
          _
      $region24: #{tpu_custom_call.1} parent=5 // pred_fallthru
        _
      %p166 = scmp.le.s32.totalorder 1, %s16
      %p167 = scmp.lt.s32.totalorder %s16, 3
      %p168 = pnand %p166, %p167
      %p169 = pneg %p168
      // Predicated region
      $region29: #{tpu_custom_call.1} parent=5 // pred_check
        _
      $region30: #{tpu_custom_call.1} parent=5 // pred_check_branch
        %171 = sbr.rel (%p168) target = $region32
      $region31: #{tpu_custom_call.1} parent=5 // pred_region
        %s172 = ssub.s32 %s16, 1
        %s173 = sand.u32 %s29, 1
        %s174 = scalar_lea.sflag [#allocation3], %s173
        %s175 = sand.u32 %s29, 1
        %s176 = smul.addr %s175, 128
        %s177 = scalar_lea.vmem [#allocation2], %s176
        // Predicated region
        $region33: #{tpu_custom_call.1} parent=31 // pred_check
          %p178 = pneg %p42
        $region34: #{tpu_custom_call.1} parent=31 // pred_check_branch
          %180 = sbr.rel (%p178) target = $region36
        $region35: #{tpu_custom_call.1} parent=31 // pred_region
          %181 = dma.done %s174, 2048
        $region36: #{tpu_custom_call.1} parent=31 // pred_fallthru
          _
        // Predicated region
        $region37: #{tpu_custom_call.1} parent=31 // pred_check
          %p182 = pneg %p63
        $region38: #{tpu_custom_call.1} parent=31 // pred_check_branch
          %184 = sbr.rel (%p182) target = $region40
        $region39: #{tpu_custom_call.1} parent=31 // pred_region
          %185 = dma.done [#allocation6], 4096
        $region40: #{tpu_custom_call.1} parent=31 // pred_fallthru
          _
        %s186 = sand.u32 %s29, 1
        %s187 = scalar_lea.sflag [#allocation3], %s186
        %s188 = sand.u32 %s29, 1
        %s189 = smul.addr %s188, 128
        %s190 = scalar_lea.vmem [#allocation2], %s189
        %p191 = pneg %p42
        %p192 = pneg %p39
        %p193 = pneg %p63
        %p194 = pneg %p60
        %p195 = pneg %p84
        %p196 = pneg %p81
        %p197 = pneg %p110
        %p198 = pneg %p107
        %s199 = sand.u32 %s97, 1
        %s200 = scalar_lea.sflag [#allocation4], %s199
        %s201 = sand.u32 %s97, 1
        %s202 = smul.addr %s201, 128
        %s203 = scalar_lea.vmem [#allocation7], %s202
        %s204 = smul.u32 16, %s21
        %s205 = smul.u32 16, %s21
        %v206 = vld [vmem:[%s177] sm:$0xff]
        %v207 = vld [vmem:[%s177 + $0x8] sm:$0xff]
        %v208 = vld [vmem:[%s177 + $0x10] sm:$0xff]
        %v209 = vld [vmem:[%s177 + $0x18] sm:$0xff]
        %v210 = vld [vmem:[%s177 + $0x20] sm:$0xff]
        %v211 = vld [vmem:[%s177 + $0x28] sm:$0xff]
        %v212 = vld [vmem:[%s177 + $0x30] sm:$0xff]
        %v213 = vld [vmem:[%s177 + $0x38] sm:$0xff]
        %v214 = vld [vmem:[%s177 + $0x40] sm:$0xff]
        %v215 = vld [vmem:[%s177 + $0x48] sm:$0xff]
        %v216 = vld [vmem:[%s177 + $0x50] sm:$0xff]
        %v217 = vld [vmem:[%s177 + $0x58] sm:$0xff]
        %v218 = vld [vmem:[%s177 + $0x60] sm:$0xff]
        %v219 = vld [vmem:[%s177 + $0x68] sm:$0xff]
        %v220 = vld [vmem:[%s177 + $0x70] sm:$0xff]
        %v221 = vld [vmem:[%s177 + $0x78] sm:$0xff]
        %v222 = vld [vmem:[#allocation5] sm:$0xff]
        %v223 = vld [vmem:[#allocation5 + $0x8] sm:$0xff]
        %v224 = vld [vmem:[#allocation5 + $0x10] sm:$0xff]
        %v225 = vld [vmem:[#allocation5 + $0x18] sm:$0xff]
        %v226 = vld [vmem:[#allocation5 + $0x20] sm:$0xff]
        %v227 = vld [vmem:[#allocation5 + $0x28] sm:$0xff]
        %v228 = vld [vmem:[#allocation5 + $0x30] sm:$0xff]
        %v229 = vld [vmem:[#allocation5 + $0x38] sm:$0xff]
        %v230 = vld [vmem:[#allocation5 + $0x40] sm:$0xff]
        %v231 = vld [vmem:[#allocation5 + $0x48] sm:$0xff]
        %v232 = vld [vmem:[#allocation5 + $0x50] sm:$0xff]
        %v233 = vld [vmem:[#allocation5 + $0x58] sm:$0xff]
        %v234 = vld [vmem:[#allocation5 + $0x60] sm:$0xff]
        %v235 = vld [vmem:[#allocation5 + $0x68] sm:$0xff]
        %v236 = vld [vmem:[#allocation5 + $0x70] sm:$0xff]
        %v237 = vld [vmem:[#allocation5 + $0x78] sm:$0xff]
        %v238 = vld [vmem:[#allocation5 + $0x80] sm:$0xff]
        %v239 = vld [vmem:[#allocation5 + $0x88] sm:$0xff]
        %v240 = vld [vmem:[#allocation5 + $0x90] sm:$0xff]
        %v241 = vld [vmem:[#allocation5 + $0x98] sm:$0xff]
        %v242 = vld [vmem:[#allocation5 + $0xa0] sm:$0xff]
        %v243 = vld [vmem:[#allocation5 + $0xa8] sm:$0xff]
        %v244 = vld [vmem:[#allocation5 + $0xb0] sm:$0xff]
        %v245 = vld [vmem:[#allocation5 + $0xb8] sm:$0xff]
        %v246 = vld [vmem:[#allocation5 + $0xc0] sm:$0xff]
        %v247 = vld [vmem:[#allocation5 + $0xc8] sm:$0xff]
        %v248 = vld [vmem:[#allocation5 + $0xd0] sm:$0xff]
        %v249 = vld [vmem:[#allocation5 + $0xd8] sm:$0xff]
        %v250 = vld [vmem:[#allocation5 + $0xe0] sm:$0xff]
        %v251 = vld [vmem:[#allocation5 + $0xe8] sm:$0xff]
        %v252 = vld [vmem:[#allocation5 + $0xf0] sm:$0xff]
        %v253 = vld [vmem:[#allocation5 + $0xf8] sm:$0xff]
        %v254 = vld [vmem:[%s2] sm:$0x3]
        %v256 = vlaneseq
        %v257 = vshrl.u32 %v256, 7
        %v258 = vsub.s32 0, %v257
        %v259 = vrot.slane %v254, %v258
        %v260 = vlaneseq
        %v261 = vshrl.u32 %v260, 7
        %v262 = vsub.s32 1, %v261
        %v263 = vrot.slane %v254, %v262
        %266 = vmatprep.subr.mxu0 %v223
        %267 = vmatpush1.msra.mxu0 %v222
        %268 = vmatprep.subr.mxu0 %v225
        %269 = vmatpush1.msra.mxu0 %v224
        %270 = vmatprep.subr.mxu0 %v227
        %271 = vmatpush1.msra.mxu0 %v226
        %272 = vmatprep.subr.mxu0 %v229
        %273 = vmatpush1.msra.mxu0 %v228
        %274 = vmatprep.subr.mxu0 %v231
        %275 = vmatpush1.msra.mxu0 %v230
        %276 = vmatprep.subr.mxu0 %v233
        %277 = vmatpush1.msra.mxu0 %v232
        %278 = vmatprep.subr.mxu0 %v235
        %279 = vmatpush1.msra.mxu0 %v234
        %280 = vmatprep.subr.mxu0 %v237
        %281 = vmatpush1.msra.mxu0 %v236
        %282 = vmatprep.subr.mxu0 %v239
        %283 = vmatpush1.msra.mxu0 %v238
        %284 = vmatprep.subr.mxu0 %v241
        %285 = vmatpush1.msra.mxu0 %v240
        %286 = vmatprep.subr.mxu0 %v243
        %287 = vmatpush1.msra.mxu0 %v242
        %288 = vmatprep.subr.mxu0 %v245
        %289 = vmatpush1.msra.mxu0 %v244
        %290 = vmatprep.subr.mxu0 %v247
        %291 = vmatpush1.msra.mxu0 %v246
        %292 = vmatprep.subr.mxu0 %v249
        %293 = vmatpush1.msra.mxu0 %v248
        %294 = vmatprep.subr.mxu0 %v251
        %295 = vmatpush1.msra.mxu0 %v250
        %296 = vmatprep.subr.mxu0 %v253
        %297 = vmatpush1.msra.mxu0 %v252
        %298 = vmatprep.subr.mxu0 0.0
        %299 = vmatpush1.msra.mxu0 0.0
        %300 = vmatprep.subr.mxu0 0.0
        %301 = vmatpush1.msra.mxu0 0.0
        %302 = vmatprep.subr.mxu0 0.0
        %303 = vmatpush1.msra.mxu0 0.0
        %304 = vmatprep.subr.mxu0 0.0
        %305 = vmatpush1.msra.mxu0 0.0
        %306 = vmatprep.subr.mxu0 0.0
        %307 = vmatpush1.msra.mxu0 0.0
        %308 = vmatprep.subr.mxu0 0.0
        %309 = vmatpush1.msra.mxu0 0.0
        %310 = vmatprep.subr.mxu0 0.0
        %311 = vmatpush1.msra.mxu0 0.0
        %312 = vmatprep.subr.mxu0 0.0
        %313 = vmatpush1.msra.mxu0 0.0
        %314 = vmatprep.subr.mxu0 0.0
        %315 = vmatpush1.msra.mxu0 0.0
        %316 = vmatprep.subr.mxu0 0.0
        %317 = vmatpush1.msra.mxu0 0.0
        %318 = vmatprep.subr.mxu0 0.0
        %319 = vmatpush1.msra.mxu0 0.0
        %320 = vmatprep.subr.mxu0 0.0
        %321 = vmatpush1.msra.mxu0 0.0
        %322 = vmatprep.subr.mxu0 0.0
        %323 = vmatpush1.msra.mxu0 0.0
        %324 = vmatprep.subr.mxu0 0.0
        %325 = vmatpush1.msra.mxu0 0.0
        %326 = vmatprep.subr.mxu0 0.0
        %327 = vmatpush1.msra.mxu0 0.0
        %328 = vmatprep.subr.mxu0 0.0
        %329 = vmatpush1.msra.mxu0 0.0
        %330 = vmatprep.mubr.f32.mxu0 0.0
        %331 = vmatmul.mubr.f32.gmra.mrb[0].mxu0 %v206
        %v332 = vpop.f32.mrb[0].mxu0
        %v333 = vadd.f32 %v259, %v332
        %v334 = vpop.f32.mrb[0].mxu0
        %v335 = vadd.f32 %v263, %v334
        %336 = vmatprep.mubr.f32.mxu0 0.0
        %337 = vmatmul.mubr.f32.gmra.mrb[0].mxu0 %v207
        %v338 = vpop.f32.mrb[0].mxu0
        %v339 = vadd.f32 %v259, %v338
        %v340 = vpop.f32.mrb[0].mxu0
        %v341 = vadd.f32 %v263, %v340
        %342 = vmatprep.mubr.f32.mxu0 0.0
        %343 = vmatmul.mubr.f32.gmra.mrb[0].mxu0 %v208
        %v344 = vpop.f32.mrb[0].mxu0
        %v345 = vadd.f32 %v259, %v344
        %v346 = vpop.f32.mrb[0].mxu0
        %v347 = vadd.f32 %v263, %v346
        %348 = vmatprep.mubr.f32.mxu0 0.0
        %349 = vmatmul.mubr.f32.gmra.mrb[0].mxu0 %v209
        %v350 = vpop.f32.mrb[0].mxu0
        %v351 = vadd.f32 %v259, %v350
        %v352 = vpop.f32.mrb[0].mxu0
        %v353 = vadd.f32 %v263, %v352
        %354 = vmatprep.mubr.f32.mxu0 0.0
        %355 = vmatmul.mubr.f32.gmra.mrb[0].mxu0 %v210
        %v356 = vpop.f32.mrb[0].mxu0
        %v357 = vadd.f32 %v259, %v356
        %v358 = vpop.f32.mrb[0].mxu0
        %v359 = vadd.f32 %v263, %v358
        %360 = vmatprep.mubr.f32.mxu0 0.0
        %361 = vmatmul.mubr.f32.gmra.mrb[0].mxu0 %v211
        %v362 = vpop.f32.mrb[0].mxu0
        %v363 = vadd.f32 %v259, %v362
        %v364 = vpop.f32.mrb[0].mxu0
        %v365 = vadd.f32 %v263, %v364
        %366 = vmatprep.mubr.f32.mxu0 0.0
        %367 = vmatmul.mubr.f32.gmra.mrb[0].mxu0 %v212
        %v368 = vpop.f32.mrb[0].mxu0
        %v369 = vadd.f32 %v259, %v368
        %v370 = vpop.f32.mrb[0].mxu0
        %v371 = vadd.f32 %v263, %v370
        %372 = vmatprep.mubr.f32.mxu0 0.0
        %373 = vmatmul.mubr.f32.gmra.mrb[0].mxu0 %v213
        %v374 = vpop.f32.mrb[0].mxu0
        %v375 = vadd.f32 %v259, %v374
        %v376 = vpop.f32.mrb[0].mxu0
        %v377 = vadd.f32 %v263, %v376
        %378 = vmatprep.mubr.f32.mxu0 0.0
        %379 = vmatmul.mubr.f32.gmra.mrb[0].mxu0 %v214
        %v380 = vpop.f32.mrb[0].mxu0
        %v381 = vadd.f32 %v259, %v380
        %v382 = vpop.f32.mrb[0].mxu0
        %v383 = vadd.f32 %v263, %v382
        %384 = vmatprep.mubr.f32.mxu0 0.0
        %385 = vmatmul.mubr.f32.gmra.mrb[0].mxu0 %v215
        %v386 = vpop.f32.mrb[0].mxu0
        %v387 = vadd.f32 %v259, %v386
        %v388 = vpop.f32.mrb[0].mxu0
        %v389 = vadd.f32 %v263, %v388
        %390 = vmatprep.mubr.f32.mxu0 0.0
        %391 = vmatmul.mubr.f32.gmra.mrb[0].mxu0 %v216
        %v392 = vpop.f32.mrb[0].mxu0
        %v393 = vadd.f32 %v259, %v392
        %v394 = vpop.f32.mrb[0].mxu0
        %v395 = vadd.f32 %v263, %v394
        %396 = vmatprep.mubr.f32.mxu0 0.0
        %397 = vmatmul.mubr.f32.gmra.mrb[0].mxu0 %v217
        %v398 = vpop.f32.mrb[0].mxu0
        %v399 = vadd.f32 %v259, %v398
        %v400 = vpop.f32.mrb[0].mxu0
        %v401 = vadd.f32 %v263, %v400
        %402 = vmatprep.mubr.f32.mxu0 0.0
        %403 = vmatmul.mubr.f32.gmra.mrb[0].mxu0 %v218
        %v404 = vpop.f32.mrb[0].mxu0
        %v405 = vadd.f32 %v259, %v404
        %v406 = vpop.f32.mrb[0].mxu0
        %v407 = vadd.f32 %v263, %v406
        %408 = vmatprep.mubr.f32.mxu0 0.0
        %409 = vmatmul.mubr.f32.gmra.mrb[0].mxu0 %v219
        %v410 = vpop.f32.mrb[0].mxu0
        %v411 = vadd.f32 %v259, %v410
        %v412 = vpop.f32.mrb[0].mxu0
        %v413 = vadd.f32 %v263, %v412
        %414 = vmatprep.mubr.f32.mxu0 0.0
        %415 = vmatmul.mubr.f32.gmra.mrb[0].mxu0 %v220
        %v416 = vpop.f32.mrb[0].mxu0
        %v417 = vadd.f32 %v259, %v416
        %v418 = vpop.f32.mrb[0].mxu0
        %v419 = vadd.f32 %v263, %v418
        %420 = vmatprep.mubr.f32.mxu0 0.0
        %421 = vmatmul.mubr.f32.gmra.mrb[0].mxu0 %v221
        %v422 = vpop.f32.mrb[0].mxu0
        %v423 = vadd.f32 %v259, %v422
        %v424 = vpop.f32.mrb[0].mxu0
        %v425 = vadd.f32 %v263, %v424
        %426 = vdwg.mxu0
        %v427 = vadd.f32 %v333, -2.0
        %v428 = vadd.f32 %v339, -2.0
        %v429 = vadd.f32 %v345, -2.0
        %v430 = vadd.f32 %v351, -2.0
        %v431 = vadd.f32 %v357, -2.0
        %v432 = vadd.f32 %v363, -2.0
        %v433 = vadd.f32 %v369, -2.0
        %v434 = vadd.f32 %v375, -2.0
        %v435 = vadd.f32 %v381, -2.0
        %v436 = vadd.f32 %v387, -2.0
        %v437 = vadd.f32 %v393, -2.0
        %v438 = vadd.f32 %v399, -2.0
        %v439 = vadd.f32 %v405, -2.0
        %v440 = vadd.f32 %v411, -2.0
        %v441 = vadd.f32 %v417, -2.0
        %v442 = vadd.f32 %v423, -2.0
        %v443 = vxor.u32 %v427, 2147483648
        %v444 = vxor.u32 %v428, 2147483648
        %v445 = vxor.u32 %v429, 2147483648
        %v446 = vxor.u32 %v430, 2147483648
        %v447 = vxor.u32 %v431, 2147483648
        %v448 = vxor.u32 %v432, 2147483648
        %v449 = vxor.u32 %v433, 2147483648
        %v450 = vxor.u32 %v434, 2147483648
        %v451 = vxor.u32 %v435, 2147483648
        %v452 = vxor.u32 %v436, 2147483648
        %v453 = vxor.u32 %v437, 2147483648
        %v454 = vxor.u32 %v438, 2147483648
        %v455 = vxor.u32 %v439, 2147483648
        %v456 = vxor.u32 %v440, 2147483648
        %v457 = vxor.u32 %v441, 2147483648
        %v458 = vxor.u32 %v442, 2147483648
        %v459 = vmul.f32 %v443, 1.442695
        %v460 = vpow.pop %v459
        %v461 = vmul.f32 %v444, 1.442695
        %v462 = vpow.pop %v461
        %v463 = vmul.f32 %v445, 1.442695
        %v464 = vpow.pop %v463
        %v465 = vmul.f32 %v446, 1.442695
        %v466 = vpow.pop %v465
        %v467 = vmul.f32 %v447, 1.442695
        %v468 = vpow.pop %v467
        %v469 = vmul.f32 %v448, 1.442695
        %v470 = vpow.pop %v469
        %v471 = vmul.f32 %v449, 1.442695
        %v472 = vpow.pop %v471
        %v473 = vmul.f32 %v450, 1.442695
        %v474 = vpow.pop %v473
        %v475 = vmul.f32 %v451, 1.442695
        %v476 = vpow.pop %v475
        %v477 = vmul.f32 %v452, 1.442695
        %v478 = vpow.pop %v477
        %v479 = vmul.f32 %v453, 1.442695
        %v480 = vpow.pop %v479
        %v481 = vmul.f32 %v454, 1.442695
        %v482 = vpow.pop %v481
        %v483 = vmul.f32 %v455, 1.442695
        %v484 = vpow.pop %v483
        %v485 = vmul.f32 %v456, 1.442695
        %v486 = vpow.pop %v485
        %v487 = vmul.f32 %v457, 1.442695
        %v488 = vpow.pop %v487
        %v489 = vmul.f32 %v458, 1.442695
        %v490 = vpow.pop %v489
        %v491 = vadd.f32 %v460, 1.0
        %v492 = vadd.f32 %v462, 1.0
        %v493 = vadd.f32 %v464, 1.0
        %v494 = vadd.f32 %v466, 1.0
        %v495 = vadd.f32 %v468, 1.0
        %v496 = vadd.f32 %v470, 1.0
        %v497 = vadd.f32 %v472, 1.0
        %v498 = vadd.f32 %v474, 1.0
        %v499 = vadd.f32 %v476, 1.0
        %v500 = vadd.f32 %v478, 1.0
        %v501 = vadd.f32 %v480, 1.0
        %v502 = vadd.f32 %v482, 1.0
        %v503 = vadd.f32 %v484, 1.0
        %v504 = vadd.f32 %v486, 1.0
        %v505 = vadd.f32 %v488, 1.0
        %v506 = vadd.f32 %v490, 1.0
        %v507 = vrcp.pop %v491
        %v508 = vmul.f32 1.0, %v507
        %v509 = vrcp.pop %v492
        %v510 = vmul.f32 1.0, %v509
        %v511 = vrcp.pop %v493
        %v512 = vmul.f32 1.0, %v511
        %v513 = vrcp.pop %v494
        %v514 = vmul.f32 1.0, %v513
        %v515 = vrcp.pop %v495
        %v516 = vmul.f32 1.0, %v515
        %v517 = vrcp.pop %v496
        %v518 = vmul.f32 1.0, %v517
        %v519 = vrcp.pop %v497
        %v520 = vmul.f32 1.0, %v519
        %v521 = vrcp.pop %v498
        %v522 = vmul.f32 1.0, %v521
        %v523 = vrcp.pop %v499
        %v524 = vmul.f32 1.0, %v523
        %v525 = vrcp.pop %v500
        %v526 = vmul.f32 1.0, %v525
        %v527 = vrcp.pop %v501
        %v528 = vmul.f32 1.0, %v527
        %v529 = vrcp.pop %v502
        %v530 = vmul.f32 1.0, %v529
        %v531 = vrcp.pop %v503
        %v532 = vmul.f32 1.0, %v531
        %v533 = vrcp.pop %v504
        %v534 = vmul.f32 1.0, %v533
        %v535 = vrcp.pop %v505
        %v536 = vmul.f32 1.0, %v535
        %v537 = vrcp.pop %v506
        %v538 = vmul.f32 1.0, %v537
        %v539 = vmax.f32 %v335, 0.0
        %v540 = vmax.f32 %v341, 0.0
        %v541 = vmax.f32 %v347, 0.0
        %v542 = vmax.f32 %v353, 0.0
        %v543 = vmax.f32 %v359, 0.0
        %v544 = vmax.f32 %v365, 0.0
        %v545 = vmax.f32 %v371, 0.0
        %v546 = vmax.f32 %v377, 0.0
        %v547 = vmax.f32 %v383, 0.0
        %v548 = vmax.f32 %v389, 0.0
        %v549 = vmax.f32 %v395, 0.0
        %v550 = vmax.f32 %v401, 0.0
        %v551 = vmax.f32 %v407, 0.0
        %v552 = vmax.f32 %v413, 0.0
        %v553 = vmax.f32 %v419, 0.0
        %v554 = vmax.f32 %v425, 0.0
        %v555 = vmul.f32 %v508, %v539
        %v556 = vmul.f32 %v510, %v540
        %v557 = vmul.f32 %v512, %v541
        %v558 = vmul.f32 %v514, %v542
        %v559 = vmul.f32 %v516, %v543
        %v560 = vmul.f32 %v518, %v544
        %v561 = vmul.f32 %v520, %v545
        %v562 = vmul.f32 %v522, %v546
        %v563 = vmul.f32 %v524, %v547
        %v564 = vmul.f32 %v526, %v548
        %v565 = vmul.f32 %v528, %v549
        %v566 = vmul.f32 %v530, %v550
        %v567 = vmul.f32 %v532, %v551
        %v568 = vmul.f32 %v534, %v552
        %v569 = vmul.f32 %v536, %v553
        %v570 = vmul.f32 %v538, %v554
        %v571 = vsub.f32 1.0, %v508
        %v572 = vsub.f32 1.0, %v510
        %v573 = vsub.f32 1.0, %v512
        %v574 = vsub.f32 1.0, %v514
        %v575 = vsub.f32 1.0, %v516
        %v576 = vsub.f32 1.0, %v518
        %v577 = vsub.f32 1.0, %v520
        %v578 = vsub.f32 1.0, %v522
        %v579 = vsub.f32 1.0, %v524
        %v580 = vsub.f32 1.0, %v526
        %v581 = vsub.f32 1.0, %v528
        %v582 = vsub.f32 1.0, %v530
        %v583 = vsub.f32 1.0, %v532
        %v584 = vsub.f32 1.0, %v534
        %v585 = vsub.f32 1.0, %v536
        %v586 = vsub.f32 1.0, %v538
        %v587 = vmul.f32 %v571, %v206
        %v588 = vmul.f32 %v572, %v207
        %v589 = vmul.f32 %v573, %v208
        %v590 = vmul.f32 %v574, %v209
        %v591 = vmul.f32 %v575, %v210
        %v592 = vmul.f32 %v576, %v211
        %v593 = vmul.f32 %v577, %v212
        %v594 = vmul.f32 %v578, %v213
        %v595 = vmul.f32 %v579, %v214
        %v596 = vmul.f32 %v580, %v215
        %v597 = vmul.f32 %v581, %v216
        %v598 = vmul.f32 %v582, %v217
        %v599 = vmul.f32 %v583, %v218
        %v600 = vmul.f32 %v584, %v219
        %v601 = vmul.f32 %v585, %v220
        %v602 = vmul.f32 %v586, %v221
        %v603 = vadd.f32 %v555, %v587
        %v604 = vadd.f32 %v556, %v588
        %v605 = vadd.f32 %v557, %v589
        %v606 = vadd.f32 %v558, %v590
        %v607 = vadd.f32 %v559, %v591
        %v608 = vadd.f32 %v560, %v592
        %v609 = vadd.f32 %v561, %v593
        %v610 = vadd.f32 %v562, %v594
        %v611 = vadd.f32 %v563, %v595
        %v612 = vadd.f32 %v564, %v596
        %v613 = vadd.f32 %v565, %v597
        %v614 = vadd.f32 %v566, %v598
        %v615 = vadd.f32 %v567, %v599
        %v616 = vadd.f32 %v568, %v600
        %v617 = vadd.f32 %v569, %v601
        %v618 = vadd.f32 %v570, %v602
        %619 = vst [vmem:[%s203] sm:$0xff] %v603
        %620 = vst [vmem:[%s203 + $0x8] sm:$0xff] %v604
        %621 = vst [vmem:[%s203 + $0x10] sm:$0xff] %v605
        %622 = vst [vmem:[%s203 + $0x18] sm:$0xff] %v606
        %623 = vst [vmem:[%s203 + $0x20] sm:$0xff] %v607
        %624 = vst [vmem:[%s203 + $0x28] sm:$0xff] %v608
        %625 = vst [vmem:[%s203 + $0x30] sm:$0xff] %v609
        %626 = vst [vmem:[%s203 + $0x38] sm:$0xff] %v610
        %627 = vst [vmem:[%s203 + $0x40] sm:$0xff] %v611
        %628 = vst [vmem:[%s203 + $0x48] sm:$0xff] %v612
        %629 = vst [vmem:[%s203 + $0x50] sm:$0xff] %v613
        %630 = vst [vmem:[%s203 + $0x58] sm:$0xff] %v614
        %631 = vst [vmem:[%s203 + $0x60] sm:$0xff] %v615
        %632 = vst [vmem:[%s203 + $0x68] sm:$0xff] %v616
        %633 = vst [vmem:[%s203 + $0x70] sm:$0xff] %v617
        %634 = vst [vmem:[%s203 + $0x78] sm:$0xff] %v618
        %s635 = sand.u32 %s97, 1
        %s636 = scalar_lea.sflag [#allocation4], %s635
        %s637 = sand.u32 %s97, 1
        %s638 = smul.addr %s637, 128
        %s639 = scalar_lea.vmem [#allocation7], %s638
        // Predicated region
        $region41: #{tpu_custom_call.1} parent=31 // pred_check
          %p640 = pneg %p107
        $region42: #{tpu_custom_call.1} parent=31 // pred_check_branch
          %642 = sbr.rel (%p640) target = $region44
        $region43: #{tpu_custom_call.1} parent=31 // pred_region
          %s643 = smul.u32 16, %s21
          %s645 = ssub.s32 2048, 2048
          %646 = vsyncadd %s636, %s645
          %s647 = smul.addr %s643, 128
          %s648 = scalar_lea.hbm %s3, %s647
          %s649 = sshll.u32 %s639, 4
          %s650 = int_to_ptr.vmem [resolvable:$true] %s649
          %655 = dma.vmem_to_hbm [thread:$0]  %s650, 2048, %s648, %s636, 128, 128, 8
        $region44: #{tpu_custom_call.1} parent=31 // pred_fallthru
          _
      $region32: #{tpu_custom_call.1} parent=5 // pred_fallthru
        _
      %p656 = scmp.le.s32.totalorder 2, %s16
      // Predicated region
      $region45: #{tpu_custom_call.1} parent=5 // pred_check
        %p657 = pneg %p656
      $region46: #{tpu_custom_call.1} parent=5 // pred_check_branch
        %659 = sbr.rel (%p657) target = $region48
      $region47: #{tpu_custom_call.1} parent=5 // pred_region
        %s660 = ssub.s32 %s16, 2
        // Predicated region
        $region49: #{tpu_custom_call.1} parent=47 // pred_check
          %p661 = pneg %p113
        $region50: #{tpu_custom_call.1} parent=47 // pred_check_branch
          %663 = sbr.rel (%p661) target = $region52
        $region51: #{tpu_custom_call.1} parent=47 // pred_region
          %s664 = sand.u32 %s98, 1
          %s665 = scalar_lea.sflag [#allocation4], %s664
          %s666 = sand.u32 %s98, 1
          %s667 = smul.addr %s666, 128
          %s668 = scalar_lea.vmem [#allocation7], %s667
          %669 = dma.done %s665, 2048
        $region52: #{tpu_custom_call.1} parent=47 // pred_fallthru
          _
      $region48: #{tpu_custom_call.1} parent=5 // pred_fallthru
        _
    $region6: #{tpu_custom_call.1} parent=1 // loop_footer
      %s20 = sadd.s32 1, %s16
    $region7: #{tpu_custom_call.1} parent=1 // loop_footer_branch
      %15 = sbr.rel target = $region3
    $region8: #{tpu_custom_call.1} parent=1 // loop_exit
      _
    %670 = vsyncpa [#allocation3], 1
    %s671 = scalar_lea.sflag [#allocation3], 1
    %672 = vsyncpa %s671, 1
    %673 = vsyncpa [#allocation6], 1
    %674 = vsyncpa [#allocation4], 1
    %s675 = scalar_lea.sflag [#allocation4], 1
    %676 = vsyncpa %s675, 1

</llo_original>
